<compile_context>
chip_gen: v5e
topology: v5e:2x2
jax: 0.10.0
libtpu: 0.0.40
codegen_flags: <defaults>
</compile_context>

<pallas_src>
import math
import jax
import jax.numpy as jnp
from jax.experimental import pallas as pl
from jax.experimental.pallas import tpu as pltpu


def attn_kernel(q_ref, k_ref, v_ref, mask_ref, w_ref, b_ref, o_ref):
    # q/k/v refs: (M, D) with M = S*B rows in (s, b) row-major order.
    # w_ref: (D, 3*Dh) fused [Wq*scale | Wk | Wv] (pre-transposed); b_ref: (1, 3*Dh).
    M = q_ref.shape[0]
    Dh = o_ref.shape[1]

    # Fused QKV projection: sublane-concat the three inputs, one MXU matmul,
    # then take the diagonal blocks (static slices).
    x = jnp.concatenate([q_ref[...], k_ref[...], v_ref[...]], axis=0)      # (3M, D)
    proj = jnp.dot(x, w_ref[...], preferred_element_type=jnp.float32)      # (3M, 3Dh)
    proj = proj + b_ref[...]
    q = proj[0:M, 0:Dh]                    # already scaled by 1/sqrt(Dh) (folded)
    k = proj[M:2 * M, Dh:2 * Dh]
    v = proj[2 * M:3 * M, 2 * Dh:3 * Dh]

    # scores[i, j] = q[i] . k[j] -- contract last dims directly, no explicit k.T.
    scores = jax.lax.dot_general(
        q, k, dimension_numbers=(((1,), (1,)), ((), ())),
        preferred_element_type=jnp.float32)
    # Combined mask: attn_mask on same-batch entries, -1e30 on cross-batch entries.
    scores = scores + mask_ref[...]

    # Numerically stable row-wise softmax; cross-batch entries exp to exactly 0.
    m = jnp.max(scores, axis=-1, keepdims=True)
    e = jnp.exp(scores - m)
    denom = jnp.sum(e, axis=-1, keepdims=True)
    p = e * pl.reciprocal(denom, approx=True)        # EUP reciprocal, no VPU divide

    out = jnp.dot(p, v, preferred_element_type=jnp.float32)                # (M, Dh)
    o_ref[...] = out.astype(o_ref.dtype)


def prepare_params(attn_mask, wq, bq, wk, bk, wv, bv, S, B):
    """One-time init-side parameter prep (kept OUT of the per-call hot path)."""
    Dh, D = wq.shape
    scale = 1.0 / math.sqrt(Dh)
    # Fused, pre-transposed projection weights; attention scale folded into Wq/bq.
    w_qkv = jnp.concatenate([(wq * scale).T, wk.T, wv.T], axis=1)      # (D, 3*Dh)
    b_qkv = jnp.concatenate([bq * scale, bk, bv]).reshape(1, 3 * Dh)   # (1, 3*Dh)

    # Combined (M, M) additive mask: same-batch -> attn_mask[s_i, s_j],
    # cross-batch -> -1e30 (softmax weight exactly 0). Row index = s*B + b, so the
    # kernel needs no transposes and one 2-D score matmul handles all batches.
    M = S * B
    idx = jnp.arange(M)
    s_idx = idx // B
    b_idx = idx % B
    mask_full = jnp.where(
        b_idx[:, None] == b_idx[None, :],
        attn_mask[s_idx[:, None], s_idx[None, :]],
        jnp.float32(-1e30)).astype(jnp.float32)                        # keep f32
    return w_qkv, b_qkv, mask_full


@jax.jit
def model_forward(query, key, value, mask_full, w_qkv, b_qkv):
    """query/key/value: (S, B, D); mask_full: (S*B, S*B); w_qkv: (D, 3*Dh)."""
    S, B, D = query.shape
    Dh = w_qkv.shape[1] // 3
    M = S * B

    # Free (row-major) reshapes -- no HBM transpose round trips. Row index = s*B + b.
    q2 = query.reshape(M, D)
    k2 = key.reshape(M, D)
    v2 = value.reshape(M, D)

    vmem_spec = pl.BlockSpec(memory_space=pltpu.MemorySpace.VMEM)
    out = pl.pallas_call(
        attn_kernel,
        out_shape=jax.ShapeDtypeStruct((M, Dh), query.dtype),
        in_specs=[vmem_spec] * 6,
        out_specs=vmem_spec,
        # No grid: whole problem fits in VMEM in a single invocation.
    )(q2, k2, v2, mask_full, w_qkv, b_qkv)

    return out.reshape(S, B, Dh)          # free reshape back to seq-major (S, B, Dh)


def reference_forward(query, key, value, attn_mask, wq, bq, wk, bk, wv, bv):
    q = query @ wq.T + bq
    k = key @ wk.T + bk
    v = value @ wv.T + bv
    q = jnp.swapaxes(q, 0, 1)
    k = jnp.swapaxes(k, 0, 1)
    v = jnp.swapaxes(v, 0, 1)
    qk = q @ jnp.swapaxes(k, -2, -1) / math.sqrt(q.shape[-1])
    qk = qk + attn_mask
    w = jax.nn.softmax(qk, axis=-1)
    out = w @ v
    return jnp.swapaxes(out, 0, 1)


if __name__ == "__main__":
    # Small, consistent shapes: seq=16, batch=2, hidden=32, num_heads=1 -> Dh=32
    S, B, D = 16, 2, 32
    num_heads = 1
    Dh = D // num_heads

    key0 = jax.random.PRNGKey(0)
    ks = jax.random.split(key0, 10)

    query = jax.random.normal(ks[0], (S, B, D), dtype=jnp.float32)
    key_t = jax.random.normal(ks[1], (S, B, D), dtype=jnp.float32)
    value = jax.random.normal(ks[2], (S, B, D), dtype=jnp.float32)
    attn_mask = 0.1 * jax.random.normal(ks[3], (S, S), dtype=jnp.float32)

    # Deterministic Linear parameters (like nn.Linear(hidden, hidden // num_heads))
    scale = 1.0 / math.sqrt(D)
    wq = jax.random.uniform(ks[4], (Dh, D), minval=-scale, maxval=scale, dtype=jnp.float32)
    bq = jax.random.uniform(ks[5], (Dh,), minval=-scale, maxval=scale, dtype=jnp.float32)
    wk = jax.random.uniform(ks[6], (Dh, D), minval=-scale, maxval=scale, dtype=jnp.float32)
    bk = jax.random.uniform(ks[7], (Dh,), minval=-scale, maxval=scale, dtype=jnp.float32)
    wv = jax.random.uniform(ks[8], (Dh, D), minval=-scale, maxval=scale, dtype=jnp.float32)
    bv = jax.random.uniform(ks[9], (Dh,), minval=-scale, maxval=scale, dtype=jnp.float32)

    # One-time prep (fused weights/biases + combined batch mask) -- not per-call.
    w_qkv, b_qkv, mask_full = prepare_params(attn_mask, wq, bq, wk, bk, wv, bv, S, B)
    w_qkv, b_qkv, mask_full = jax.block_until_ready((w_qkv, b_qkv, mask_full))

    out = model_forward(query, key_t, value, mask_full, w_qkv, b_qkv)
    out = jax.block_until_ready(out)

    ref = reference_forward(query, key_t, value, attn_mask, wq, bq, wk, bk, wv, bv)
    assert out.shape == (S, B, Dh), out.shape
    # approx EUP reciprocal (~1e-4 rel) + folded scaling reorder -> 2e-3 tolerance
    max_err = float(jnp.max(jnp.abs(out - ref)))
    assert max_err < 2e-3, max_err

    print("KERNEL_OK")
</pallas_src>

<mosaic_0001>
module attributes {stable_mosaic.version = 11 : i64} {
  func.func @attn_kernel(%arg0: memref<32x32xf32, #tpu.memory_space<vmem>>, %arg1: memref<32x32xf32, #tpu.memory_space<vmem>>, %arg2: memref<32x32xf32, #tpu.memory_space<vmem>>, %arg3: memref<32x32xf32, #tpu.memory_space<vmem>>, %arg4: memref<32x96xf32, #tpu.memory_space<vmem>>, %arg5: memref<1x96xf32, #tpu.memory_space<vmem>>, %arg6: memref<32x32xf32, #tpu.memory_space<vmem>>) attributes {dimension_semantics = [], scalar_prefetch = 0 : i64, scratch_operands = 0 : i64, tpu.core_type = #tpu.core_type<tc>} {
    %c0 = arith.constant 0 : index
    %c0_0 = arith.constant 0 : index
    %0 = vector.load %arg0[%c0, %c0_0] : memref<32x32xf32, #tpu.memory_space<vmem>>, vector<32x32xf32>
    %c0_1 = arith.constant 0 : index
    %c0_2 = arith.constant 0 : index
    %1 = vector.load %arg1[%c0_1, %c0_2] : memref<32x32xf32, #tpu.memory_space<vmem>>, vector<32x32xf32>
    %c0_3 = arith.constant 0 : index
    %c0_4 = arith.constant 0 : index
    %2 = vector.load %arg2[%c0_3, %c0_4] : memref<32x32xf32, #tpu.memory_space<vmem>>, vector<32x32xf32>
    %3 = tpu.concatenate %0, %1, %2 in 0 : vector<32x32xf32>, vector<32x32xf32>, vector<32x32xf32> -> vector<96x32xf32>
    %c0_5 = arith.constant 0 : index
    %c0_6 = arith.constant 0 : index
    %4 = vector.load %arg4[%c0_5, %c0_6] : memref<32x96xf32, #tpu.memory_space<vmem>>, vector<32x96xf32>
    %cst = arith.constant dense<0.000000e+00> : vector<96x96xf32>
    %5 = tpu.matmul %3, %4, %cst {dimension_numbers = #tpu.dot_dimension_numbers<[1], [0], [0], [1], [0, 0, 1, 1], [], []>} : vector<96x32xf32>, vector<32x96xf32>, vector<96x96xf32> -> vector<96x96xf32>
    %c0_7 = arith.constant 0 : index
    %c0_8 = arith.constant 0 : index
    %6 = vector.load %arg5[%c0_7, %c0_8] : memref<1x96xf32, #tpu.memory_space<vmem>>, vector<1x96xf32>
    %7 = vector.broadcast %6 : vector<1x96xf32> to vector<96x96xf32>
    %8 = arith.addf %5, %7 : vector<96x96xf32>
    %9 = vector.extract_strided_slice %8 {offsets = [0, 0], sizes = [32, 32], strides = [1, 1]} : vector<96x96xf32> to vector<32x32xf32>
    %10 = vector.extract_strided_slice %8 {offsets = [32, 32], sizes = [32, 32], strides = [1, 1]} : vector<96x96xf32> to vector<32x32xf32>
    %11 = vector.extract_strided_slice %8 {offsets = [64, 64], sizes = [32, 32], strides = [1, 1]} : vector<96x96xf32> to vector<32x32xf32>
    %cst_9 = arith.constant dense<0.000000e+00> : vector<32x32xf32>
    %12 = tpu.matmul %9, %10, %cst_9 {dimension_numbers = #tpu.dot_dimension_numbers<[1], [1], [0], [0], [0, 0, 1, 0], [], []>} : vector<32x32xf32>, vector<32x32xf32>, vector<32x32xf32> -> vector<32x32xf32>
    %c0_10 = arith.constant 0 : index
    %c0_11 = arith.constant 0 : index
    %13 = vector.load %arg3[%c0_10, %c0_11] : memref<32x32xf32, #tpu.memory_space<vmem>>, vector<32x32xf32>
    %14 = arith.addf %12, %13 : vector<32x32xf32>
    %cst_12 = arith.constant dense<0xFF800000> : vector<32xf32>
    %15 = vector.multi_reduction <maximumf>, %14, %cst_12 [1] : vector<32x32xf32> to vector<32xf32>
    %16 = vector.shape_cast %15 : vector<32xf32> to vector<32x1xf32>
    %17 = vector.broadcast %16 : vector<32x1xf32> to vector<32x32xf32>
    %18 = arith.subf %14, %17 : vector<32x32xf32>
    %19 = math.exp %18 : vector<32x32xf32>
    %cst_13 = arith.constant dense<0.000000e+00> : vector<32xf32>
    %20 = vector.multi_reduction <add>, %19, %cst_13 [1] : vector<32x32xf32> to vector<32xf32>
    %21 = vector.shape_cast %20 : vector<32xf32> to vector<32x1xf32>
    %22 = tpu.reciprocal %21 {approx = true} : vector<32x1xf32> -> vector<32x1xf32>
    %23 = vector.broadcast %22 : vector<32x1xf32> to vector<32x32xf32>
    %24 = arith.mulf %19, %23 : vector<32x32xf32>
    %cst_14 = arith.constant dense<0.000000e+00> : vector<32x32xf32>
    %25 = tpu.matmul %24, %11, %cst_14 {dimension_numbers = #tpu.dot_dimension_numbers<[1], [0], [0], [1], [0, 0, 1, 1], [], []>} : vector<32x32xf32>, vector<32x32xf32>, vector<32x32xf32> -> vector<32x32xf32>
    %c0_15 = arith.constant 0 : index
    %c0_16 = arith.constant 0 : index
    %26 = vector.load %arg6[%c0_15, %c0_16] : memref<32x32xf32, #tpu.memory_space<vmem>>, vector<32x32xf32>
    tpu.vector_store %arg6[%c0_15, %c0_16], %25 {strides = array<i32>} : memref<32x32xf32, #tpu.memory_space<vmem>>, vector<32x32xf32>,
    return
  }
}

</mosaic_0001>

<llo_original>
// kernel: model_forward.1
$region0: #{model_forward.1}
  #allocation0 [shape = 'u32[]', space=smem, size = 0x4, offset = 0x4, fixed_abs, tag = 'smem constant byte address 0x4 - core index']
  #allocation1 [shape = 'u32[72,128]{1,0:T(1,128)}', space=vmem, size = 0x9000, scoped, tag = 'internal scratch']
  %s0 = inlined_call_operand.hbm [shape: f32[32,32], index: 0, kind: input, shape index: {}]
  %s1 = inlined_call_operand.hbm [shape: f32[32,32], index: 1, kind: input, shape index: {}]
  %s2 = inlined_call_operand.hbm [shape: f32[32,32], index: 2, kind: input, shape index: {}]
  %s3 = inlined_call_operand.hbm [shape: f32[32,32], index: 3, kind: input, shape index: {}]
  %s4 = inlined_call_operand.hbm [shape: f32[32,96], index: 4, kind: input, shape index: {}]
  %s5 = inlined_call_operand.vmem [shape: f32[1,96], index: 5, kind: input, shape index: {}]
  %s6 = inlined_call_operand.hbm [shape: f32[32,32], index: 6, kind: output, shape index: {}]
  %s7 = sld [smem:[#allocation0]]
  $region54: #{model_forward.1} parent=0
    _
  %s9 = ssub.s32 1, %s7
  %s10 = scalar_select 0, %s9, %s7
  $region1: #{model_forward.1} parent=0
    #allocation2 [shape = 'u8[16384]{0}', space=vmem, size = 0x4000, scoped, tag = 'input window, operand 0, single buffered']
    #allocation3 [shape = 's32[1]{0}', space=sflag, size = 0x4, scoped, tag = 'scoped memory for model_forward.1']
    #allocation4 [shape = 's32[1]{0}', space=sflag, size = 0x4, scoped, tag = 'scoped memory for model_forward.1']
    #allocation5 [shape = 'u8[16384]{0}', space=vmem, size = 0x4000, scoped, tag = 'input window, operand 1, single buffered']
    #allocation6 [shape = 's32[1]{0}', space=sflag, size = 0x4, scoped, tag = 'scoped memory for model_forward.1']
    #allocation7 [shape = 'u8[16384]{0}', space=vmem, size = 0x4000, scoped, tag = 'input window, operand 2, single buffered']
    #allocation8 [shape = 'u8[16384]{0}', space=vmem, size = 0x4000, scoped, tag = 'input window, operand 3, single buffered']
    #allocation9 [shape = 's32[1]{0}', space=sflag, size = 0x4, scoped, tag = 'scoped memory for model_forward.1']
    #allocation10 [shape = 'u8[16384]{0}', space=vmem, size = 0x4000, scoped, tag = 'input window, operand 4, single buffered']
    #allocation11 [shape = 'u8[16384]{0}', space=vmem, size = 0x4000, scoped, tag = 'output window, operand 0, single buffered']
    %11 = vsyncpa [#allocation3], 0
    %12 = vsyncpa [#allocation6], 0
    %13 = vsyncpa [#allocation9], 0
    %14 = vsyncpa [#allocation4], 0
    // Predicated region
    $region2: #{model_forward.1} parent=1 // pred_check
      _
    $region3: #{model_forward.1} parent=1 // pred_check_branch
      %16 = sbr.rel (0) target = $region5
    $region4: #{model_forward.1} parent=1 // pred_region
      %18 = vsyncadd [#allocation3], 0
      %s19 = sshll.u32 %s0, 4
      %s20 = int_to_ptr.hbm [resolvable:$true] %s19
      %s21 = sshll.u32 [#allocation2], 4
      %s22 = int_to_ptr.vmem [resolvable:$true] %s21
      %27 = dma.hbm_to_vmem [thread:$0]  %s20, 512, %s22, [#allocation3], 128, 128, 8
    $region5: #{model_forward.1} parent=1 // pred_fallthru
      _
    // Predicated region
    $region6: #{model_forward.1} parent=1 // pred_check
      _
    $region7: #{model_forward.1} parent=1 // pred_check_branch
      %29 = sbr.rel (0) target = $region9
    $region8: #{model_forward.1} parent=1 // pred_region
      %31 = vsyncadd [#allocation6], 0
      %s32 = sshll.u32 %s1, 4
      %s33 = int_to_ptr.hbm [resolvable:$true] %s32
      %s34 = sshll.u32 [#allocation5], 4
      %s35 = int_to_ptr.vmem [resolvable:$true] %s34
      %40 = dma.hbm_to_vmem [thread:$0]  %s33, 512, %s35, [#allocation6], 128, 128, 8
    $region9: #{model_forward.1} parent=1 // pred_fallthru
      _
    // Predicated region
    $region10: #{model_forward.1} parent=1 // pred_check
      _
    $region11: #{model_forward.1} parent=1 // pred_check_branch
      %42 = sbr.rel (0) target = $region13
    $region12: #{model_forward.1} parent=1 // pred_region
      %44 = vsyncadd [#allocation6], 0
      %s45 = sshll.u32 %s2, 4
      %s46 = int_to_ptr.hbm [resolvable:$true] %s45
      %s47 = sshll.u32 [#allocation7], 4
      %s48 = int_to_ptr.vmem [resolvable:$true] %s47
      %53 = dma.hbm_to_vmem [thread:$0]  %s46, 512, %s48, [#allocation6], 128, 128, 8
    $region13: #{model_forward.1} parent=1 // pred_fallthru
      _
    // Predicated region
    $region14: #{model_forward.1} parent=1 // pred_check
      _
    $region15: #{model_forward.1} parent=1 // pred_check_branch
      %55 = sbr.rel (0) target = $region17
    $region16: #{model_forward.1} parent=1 // pred_region
      %57 = vsyncadd [#allocation9], 0
      %s58 = sshll.u32 %s3, 4
      %s59 = int_to_ptr.hbm [resolvable:$true] %s58
      %s60 = sshll.u32 [#allocation8], 4
      %s61 = int_to_ptr.vmem [resolvable:$true] %s60
      %66 = dma.hbm_to_vmem [thread:$0]  %s59, 512, %s61, [#allocation9], 128, 128, 8
    $region17: #{model_forward.1} parent=1 // pred_fallthru
      _
    // Predicated region
    $region18: #{model_forward.1} parent=1 // pred_check
      _
    $region19: #{model_forward.1} parent=1 // pred_check_branch
      %68 = sbr.rel (0) target = $region21
    $region20: #{model_forward.1} parent=1 // pred_region
      %70 = vsyncadd [#allocation9], 0
      %s71 = sshll.u32 %s4, 4
      %s72 = int_to_ptr.hbm [resolvable:$true] %s71
      %s73 = sshll.u32 [#allocation10], 4
      %s74 = int_to_ptr.vmem [resolvable:$true] %s73
      %79 = dma.hbm_to_vmem [thread:$0]  %s72, 512, %s74, [#allocation9], 128, 128, 8
    $region21: #{model_forward.1} parent=1 // pred_fallthru
      _
    // Predicated region
    $region22: #{model_forward.1} parent=1 // pred_check
      _
    $region23: #{model_forward.1} parent=1 // pred_check_branch
      %81 = sbr.rel (0) target = $region25
    $region24: #{model_forward.1} parent=1 // pred_region
      _
    $region25: #{model_forward.1} parent=1 // pred_fallthru
      _
    // Predicated region
    $region26: #{model_forward.1} parent=1 // pred_check
      _
    $region27: #{model_forward.1} parent=1 // pred_check_branch
      %83 = sbr.rel (0) target = $region29
    $region28: #{model_forward.1} parent=1 // pred_region
      %85 = dma.done [#allocation3], 512
    $region29: #{model_forward.1} parent=1 // pred_fallthru
      _
    // Predicated region
    $region30: #{model_forward.1} parent=1 // pred_check
      _
    $region31: #{model_forward.1} parent=1 // pred_check_branch
      %87 = sbr.rel (0) target = $region33
    $region32: #{model_forward.1} parent=1 // pred_region
      %89 = dma.done [#allocation6], 512
    $region33: #{model_forward.1} parent=1 // pred_fallthru
      _
    // Predicated region
    $region34: #{model_forward.1} parent=1 // pred_check
      _
    $region35: #{model_forward.1} parent=1 // pred_check_branch
      %91 = sbr.rel (0) target = $region37
    $region36: #{model_forward.1} parent=1 // pred_region
      %93 = dma.done [#allocation6], 512
    $region37: #{model_forward.1} parent=1 // pred_fallthru
      _
    // Predicated region
    $region38: #{model_forward.1} parent=1 // pred_check
      _
    $region39: #{model_forward.1} parent=1 // pred_check_branch
      %95 = sbr.rel (0) target = $region41
    $region40: #{model_forward.1} parent=1 // pred_region
      %97 = dma.done [#allocation9], 512
    $region41: #{model_forward.1} parent=1 // pred_fallthru
      _
    // Predicated region
    $region42: #{model_forward.1} parent=1 // pred_check
      _
    $region43: #{model_forward.1} parent=1 // pred_check_branch
      %99 = sbr.rel (0) target = $region45
    $region44: #{model_forward.1} parent=1 // pred_region
      %101 = dma.done [#allocation9], 512
    $region45: #{model_forward.1} parent=1 // pred_fallthru
      _
    %v102 = vld [vmem:[#allocation2] sm:$0xff]
    %v103 = vld [vmem:[#allocation2 + $0x8] sm:$0xff]
    %v104 = vld [vmem:[#allocation2 + $0x10] sm:$0xff]
    %v105 = vld [vmem:[#allocation2 + $0x18] sm:$0xff]
    %v106 = vld [vmem:[#allocation5] sm:$0xff]
    %v107 = vld [vmem:[#allocation5 + $0x8] sm:$0xff]
    %v108 = vld [vmem:[#allocation5 + $0x10] sm:$0xff]
    %v109 = vld [vmem:[#allocation5 + $0x18] sm:$0xff]
    %v110 = vld [vmem:[#allocation7] sm:$0xff]
    %v111 = vld [vmem:[#allocation7 + $0x8] sm:$0xff]
    %v112 = vld [vmem:[#allocation7 + $0x10] sm:$0xff]
    %v113 = vld [vmem:[#allocation7 + $0x18] sm:$0xff]
    %v114 = vld [vmem:[#allocation10] sm:$0xff]
    %v115 = vld [vmem:[#allocation10 + $0x8] sm:$0xff]
    %v116 = vld [vmem:[#allocation10 + $0x10] sm:$0xff]
    %v117 = vld [vmem:[#allocation10 + $0x18] sm:$0xff]
    %v118 = vld [vmem:[%s5] sm:$0x1]
    %v120 = vperm.slane %v118, 0
    %vm122 = vcmask 261120
    %v124 = vsel %vm122, %v102, 0
    %v127 = vsel %vm122, %v103, 0
    %v130 = vsel %vm122, %v104, 0
    %v133 = vsel %vm122, %v105, 0
    %v136 = vsel %vm122, %v106, 0
    %v139 = vsel %vm122, %v107, 0
    %v142 = vsel %vm122, %v108, 0
    %v145 = vsel %vm122, %v109, 0
    %v148 = vsel %vm122, %v110, 0
    %v151 = vsel %vm122, %v111, 0
    %v154 = vsel %vm122, %v112, 0
    %v157 = vsel %vm122, %v113, 0
    %159 = vmatpush.msra.mxu0 0.0
    %160 = vmatpush.msra.mxu0 0.0
    %161 = vmatpush.msra.mxu0 0.0
    %162 = vmatpush.msra.mxu0 0.0
    %163 = vmatpush.msra.mxu0 0.0
    %164 = vmatpush.msra.mxu0 0.0
    %165 = vmatpush.msra.mxu0 0.0
    %166 = vmatpush.msra.mxu0 0.0
    %167 = vmatpush.msra.mxu0 0.0
    %168 = vmatpush.msra.mxu0 0.0
    %169 = vmatpush.msra.mxu0 0.0
    %170 = vmatpush.msra.mxu0 0.0
    %171 = vmatpush.msra.mxu0 %v117
    %172 = vmatpush.msra.mxu0 %v116
    %173 = vmatpush.msra.mxu0 %v115
    %174 = vmatpush.msra.mxu0 %v114
    %175 = vmatmul.f32.gmra.mxu0 %v124
    %v176 = vpop.f32.mrf.mxu0
    %v177 = vadd.f32 %v120, %v176
    %178 = vmatmul.f32.gmra.mxu0 %v127
    %v179 = vpop.f32.mrf.mxu0
    %v180 = vadd.f32 %v120, %v179
    %181 = vmatmul.f32.gmra.mxu0 %v130
    %v182 = vpop.f32.mrf.mxu0
    %v183 = vadd.f32 %v120, %v182
    %184 = vmatmul.f32.gmra.mxu0 %v133
    %v185 = vpop.f32.mrf.mxu0
    %v186 = vadd.f32 %v120, %v185
    %187 = vmatmul.f32.gmra.mxu0 %v136
    %v188 = vpop.f32.mrf.mxu0
    %v189 = vadd.f32 %v120, %v188
    %190 = vmatmul.f32.gmra.mxu0 %v139
    %v191 = vpop.f32.mrf.mxu0
    %v192 = vadd.f32 %v120, %v191
    %193 = vmatmul.f32.gmra.mxu0 %v142
    %v194 = vpop.f32.mrf.mxu0
    %v195 = vadd.f32 %v120, %v194
    %196 = vmatmul.f32.gmra.mxu0 %v145
    %v197 = vpop.f32.mrf.mxu0
    %v198 = vadd.f32 %v120, %v197
    %199 = vmatmul.f32.gmra.mxu0 %v148
    %v200 = vpop.f32.mrf.mxu0
    %v201 = vadd.f32 %v120, %v200
    %202 = vmatmul.f32.gmra.mxu0 %v151
    %v203 = vpop.f32.mrf.mxu0
    %v204 = vadd.f32 %v120, %v203
    %205 = vmatmul.f32.gmra.mxu0 %v154
    %v206 = vpop.f32.mrf.mxu0
    %v207 = vadd.f32 %v120, %v206
    %208 = vmatmul.f32.gmra.mxu0 %v157
    %v209 = vpop.f32.mrf.mxu0
    %v210 = vadd.f32 %v120, %v209
    %211 = vdwg.mxu0
    %v212 = vld [vmem:[#allocation8] sm:$0xff]
    %v213 = vld [vmem:[#allocation8 + $0x8] sm:$0xff]
    %v214 = vld [vmem:[#allocation8 + $0x10] sm:$0xff]
    %v215 = vld [vmem:[#allocation8 + $0x18] sm:$0xff]
    %220 = vrot.lane.b32.xlu0 %v189, 96
    %v221 = vpop.permute.xlu0 %220
    %222 = vrot.lane.b32.xlu0 %v192, 96
    %v223 = vpop.permute.xlu0 %222
    %224 = vrot.lane.b32.xlu0 %v195, 96
    %v225 = vpop.permute.xlu0 %224
    %226 = vrot.lane.b32.xlu0 %v198, 96
    %v227 = vpop.permute.xlu0 %226
    %v229 = vsel %vm122, %v177, 0
    %v232 = vsel %vm122, %v180, 0
    %v235 = vsel %vm122, %v183, 0
    %v238 = vsel %vm122, %v186, 0
    %v240 = vsel %vm122, %v221, 0
    %v242 = vsel %vm122, %v223, 0
    %v244 = vsel %vm122, %v225, 0
    %v246 = vsel %vm122, %v227, 0
    %248 = vmatpush.xpose.msra.mxu0 0.0
    %249 = vmatpush.xpose.msra.mxu0 0.0
    %250 = vmatpush.xpose.msra.mxu0 0.0
    %251 = vmatpush.xpose.msra.mxu0 0.0
    %252 = vmatpush.xpose.msra.mxu0 0.0
    %253 = vmatpush.xpose.msra.mxu0 0.0
    %254 = vmatpush.xpose.msra.mxu0 0.0
    %255 = vmatpush.xpose.msra.mxu0 0.0
    %256 = vmatpush.xpose.msra.mxu0 0.0
    %257 = vmatpush.xpose.msra.mxu0 0.0
    %258 = vmatpush.xpose.msra.mxu0 0.0
    %259 = vmatpush.xpose.msra.mxu0 0.0
    %260 = vmatpush.xpose.msra.mxu0 %v246
    %261 = vmatpush.xpose.msra.mxu0 %v244
    %262 = vmatpush.xpose.msra.mxu0 %v242
    %263 = vmatpush.xpose.msra.mxu0 %v240
    %264 = vmatmul.f32.gmra.mxu0 %v229
    %v265 = vpop.f32.mrf.mxu0
    %v266 = vadd.f32 %v212, %v265
    %267 = vmatmul.f32.gmra.mxu0 %v232
    %v268 = vpop.f32.mrf.mxu0
    %v269 = vadd.f32 %v213, %v268
    %270 = vmatmul.f32.gmra.mxu0 %v235
    %v271 = vpop.f32.mrf.mxu0
    %v272 = vadd.f32 %v214, %v271
    %273 = vmatmul.f32.gmra.mxu0 %v238
    %v274 = vpop.f32.mrf.mxu0
    %v275 = vadd.f32 %v215, %v274
    %276 = vdwg.mxu0
    %v277 = vsel %vm122, %v266, -inf
    %278 = vmax.xlane.f32.xlu0 %v277
    %v279 = vpop.xlane.xlu0 %278
    %v280 = vsel %vm122, %v269, -inf
    %281 = vmax.xlane.f32.xlu0 %v280
    %v282 = vpop.xlane.xlu0 %281
    %v283 = vsel %vm122, %v272, -inf
    %284 = vmax.xlane.f32.xlu0 %v283
    %v285 = vpop.xlane.xlu0 %284
    %v286 = vsel %vm122, %v275, -inf
    %287 = vmax.xlane.f32.xlu0 %v286
    %v288 = vpop.xlane.xlu0 %287
    %v289 = vsub.f32 %v266, %v279
    %v290 = vsub.f32 %v269, %v282
    %v291 = vsub.f32 %v272, %v285
    %v292 = vsub.f32 %v275, %v288
    %v293 = vmul.f32 %v289, 1.442695
    %v294 = vpow.pop %v293
    %v295 = vmul.f32 %v290, 1.442695
    %v296 = vpow.pop %v295
    %v297 = vmul.f32 %v291, 1.442695
    %v298 = vpow.pop %v297
    %v299 = vmul.f32 %v292, 1.442695
    %v300 = vpow.pop %v299
    %v301 = vsel %vm122, %v294, 0.0
    %302 = vadd.xlane.f32.xlu0 %v301
    %v303 = vpop.xlane.xlu0 %302
    %v304 = vsel %vm122, %v296, 0.0
    %305 = vadd.xlane.f32.xlu0 %v304
    %v306 = vpop.xlane.xlu0 %305
    %v307 = vsel %vm122, %v298, 0.0
    %308 = vadd.xlane.f32.xlu0 %v307
    %v309 = vpop.xlane.xlu0 %308
    %v310 = vsel %vm122, %v300, 0.0
    %311 = vadd.xlane.f32.xlu0 %v310
    %v312 = vpop.xlane.xlu0 %311
    %v313 = vrcp.pop %v303
    %v314 = vrcp.pop %v306
    %v315 = vrcp.pop %v309
    %v316 = vrcp.pop %v312
    %v317 = vmul.f32 %v294, %v313
    %v318 = vmul.f32 %v296, %v314
    %v319 = vmul.f32 %v298, %v315
    %v320 = vmul.f32 %v300, %v316
    %325 = vrot.lane.b32.xlu0 %v201, 64
    %v326 = vpop.permute.xlu0 %325
    %327 = vrot.lane.b32.xlu0 %v204, 64
    %v328 = vpop.permute.xlu0 %327
    %329 = vrot.lane.b32.xlu0 %v207, 64
    %v330 = vpop.permute.xlu0 %329
    %331 = vrot.lane.b32.xlu0 %v210, 64
    %v332 = vpop.permute.xlu0 %331
    %v338 = vsel %vm122, %v317, 0
    %v341 = vsel %vm122, %v318, 0
    %v344 = vsel %vm122, %v319, 0
    %v347 = vsel %vm122, %v320, 0
    %349 = vmatpush.msra.mxu0 0.0
    %350 = vmatpush.msra.mxu0 0.0
    %351 = vmatpush.msra.mxu0 0.0
    %352 = vmatpush.msra.mxu0 0.0
    %353 = vmatpush.msra.mxu0 0.0
    %354 = vmatpush.msra.mxu0 0.0
    %355 = vmatpush.msra.mxu0 0.0
    %356 = vmatpush.msra.mxu0 0.0
    %357 = vmatpush.msra.mxu0 0.0
    %358 = vmatpush.msra.mxu0 0.0
    %359 = vmatpush.msra.mxu0 0.0
    %360 = vmatpush.msra.mxu0 0.0
    %361 = vmatpush.msra.mxu0 %v332
    %362 = vmatpush.msra.mxu0 %v330
    %363 = vmatpush.msra.mxu0 %v328
    %364 = vmatpush.msra.mxu0 %v326
    %365 = vmatmul.f32.gmra.mxu0 %v338
    %v366 = vpop.f32.mrf.mxu0
    %v367 = vadd.f32 0.0, %v366
    %368 = vmatmul.f32.gmra.mxu0 %v341
    %v369 = vpop.f32.mrf.mxu0
    %v370 = vadd.f32 0.0, %v369
    %371 = vmatmul.f32.gmra.mxu0 %v344
    %v372 = vpop.f32.mrf.mxu0
    %v373 = vadd.f32 0.0, %v372
    %374 = vmatmul.f32.gmra.mxu0 %v347
    %v375 = vpop.f32.mrf.mxu0
    %v376 = vadd.f32 0.0, %v375
    %377 = vdwg.mxu0
    %378 = vst.msk [vmem:[#allocation11] sm:$0xff] %vm122, %v367
    %379 = vst.msk [vmem:[#allocation11 + $0x8] sm:$0xff] %vm122, %v370
    %380 = vst.msk [vmem:[#allocation11 + $0x10] sm:$0xff] %vm122, %v373
    %381 = vst.msk [vmem:[#allocation11 + $0x18] sm:$0xff] %vm122, %v376
    // Predicated region
    $region46: #{model_forward.1} parent=1 // pred_check
      _
    $region47: #{model_forward.1} parent=1 // pred_check_branch
      %383 = sbr.rel (0) target = $region49
    $region48: #{model_forward.1} parent=1 // pred_region
      %385 = vsyncadd [#allocation4], 0
      %s386 = sshll.u32 [#allocation11], 4
      %s387 = int_to_ptr.vmem [resolvable:$true] %s386
      %s388 = sshll.u32 %s6, 4
      %s389 = int_to_ptr.hbm [resolvable:$true] %s388
      %394 = dma.vmem_to_hbm [thread:$0]  %s387, 512, %s389, [#allocation4], 128, 128, 8
    $region49: #{model_forward.1} parent=1 // pred_fallthru
      _
    // Predicated region
    $region50: #{model_forward.1} parent=1 // pred_check
      _
    $region51: #{model_forward.1} parent=1 // pred_check_branch
      %396 = sbr.rel (0) target = $region53
    $region52: #{model_forward.1} parent=1 // pred_region
      %398 = dma.done [#allocation4], 512
    $region53: #{model_forward.1} parent=1 // pred_fallthru
      _
    %399 = vsyncpa [#allocation3], 1
    %400 = vsyncpa [#allocation6], 1
    %401 = vsyncpa [#allocation9], 1
    %402 = vsyncpa [#allocation4], 1

</llo_original>
